<compile_context>
chip_gen: v5e
topology: v5e:2x2
jax: 0.10.0
libtpu: 0.0.40
codegen_flags: <defaults>
</compile_context>

<pallas_src>
import jax
import jax.numpy as jnp
from jax import lax
from jax.experimental import pallas as pl
from jax.experimental.pallas import tpu as pltpu


def _round_up(n, m):
    return ((n + m - 1) // m) * m


def decoder2_kernel(x_ref, w1t_ref, b1_ref, w2t_ref, b2_ref, o_ref):
    # x_ref:   [TB, D_in]   natural row-major batch tile (no wrapper transpose)
    # w1t_ref: [H, D_in]    layer-1 weight in [out, in] form
    # b1_ref:  [H, 1]
    # w2t_ref: [D_out, H]   layer-2 weight in [out, in] form
    # b2_ref:  [D_out, 1]
    # o_ref:   [D_out, TB]  feature-major output -> lane-dense stores
    x = x_ref[...]
    # h[H, TB]: contract on D_in (axis 1 of both operands).  Batch ends up on the
    # MXU-N / lane axis; Mosaic handles the "rhs transposed" contraction natively.
    h = lax.dot_general(
        w1t_ref[...], x,
        dimension_numbers=(((1,), (1,)), ((), ())),
        preferred_element_type=jnp.float32,
    )
    h = h + b1_ref[...]                       # bias broadcast over lanes
    h = jnp.maximum(h, 0.01 * h)              # LeakyReLU, negative_slope=0.01
    o = jnp.dot(w2t_ref[...], h, preferred_element_type=jnp.float32)  # [D_out, TB]
    o_ref[...] = (o + b2_ref[...]).astype(o_ref.dtype)


def decoder2_forward(x, w1, b1, w2, b2, *, tb_max=32768):
    """Decoder2 forward pass.

    x:  [B, 32]
    w1: [32, 64]  -- [in, out] layout, i.e. nn.Linear(32, 64).weight.T
    b1: [64]
    w2: [64, 2]   -- [in, out] layout, i.e. nn.Linear(64, 2).weight.T
    b2: [2]
    returns [B, 2]
    """
    B, D_in = x.shape
    assert w1.shape[0] == D_in, (
        "w1 must be [in, out] ([32, 64]); pass nn.Linear.weight.T, not weight")
    H = w1.shape[1]
    assert b1.shape == (H,)
    assert w2.shape[0] == H, (
        "w2 must be [in, out] ([64, 2]); pass nn.Linear.weight.T, not weight")
    D_out = w2.shape[1]
    assert b2.shape == (D_out,)

    # Only the tiny weights/biases get reshaped in the wrapper; x stays untouched
    # in HBM (no extra read+write of the big operand).
    w1t = jnp.transpose(w1)          # [H, D_in]
    w2t = jnp.transpose(w2)          # [D_out, H]
    b1c = b1.reshape(H, 1)
    b2c = b2.reshape(D_out, 1)

    # Batch tiling:
    #  - small B: a single block of exactly B rows (block == full dim is legal).
    #  - large B: big tiles (multiple of 512, capped at tb_max) to amortize the
    #    per-grid-step overhead, but at least 2 tiles so both v7x TCs get work.
    if B <= 1024:
        TB = B
    else:
        TB = min(tb_max, _round_up((B + 1) // 2, 512))
    n_tiles = (B + TB - 1) // TB     # ragged tail -> Pallas partial last block

    out_t = pl.pallas_call(
        decoder2_kernel,
        out_shape=jax.ShapeDtypeStruct((D_out, B), x.dtype),
        grid_spec=pl.GridSpec(
            grid=(n_tiles,),
            in_specs=[
                pl.BlockSpec((TB, D_in), lambda i: (i, 0)),   # x tile moves with grid
                pl.BlockSpec((H, D_in), lambda i: (0, 0)),    # weights VMEM-resident
                pl.BlockSpec((H, 1), lambda i: (0, 0)),
                pl.BlockSpec((D_out, H), lambda i: (0, 0)),
                pl.BlockSpec((D_out, 1), lambda i: (0, 0)),
            ],
            out_specs=pl.BlockSpec((D_out, TB), lambda i: (0, i)),
        ),
        compiler_params=pltpu.CompilerParams(
            dimension_semantics=("parallel",),    # independent batch tiles (megacore)
            vmem_limit_bytes=32 * 1024 * 1024,    # headroom for big TB on v5e
        ),
    )(x, w1t, b1c, w2t, b2c)

    # Output-side transpose is tiny (2 * B floats) and keeps the kernel's stores
    # lane-dense; fine to leave to XLA.
    return jnp.transpose(out_t)


def reference_forward(x, w1, b1, w2, b2):
    h = x @ w1 + b1
    h = jnp.where(h >= 0, h, 0.01 * h)
    return h @ w2 + b2


if __name__ == "__main__":
    key = jax.random.PRNGKey(0)
    k_x, k_w1, k_b1, k_w2, k_b2 = jax.random.split(key, 5)

    D_IN, H, D_OUT = 32, 64, 2

    # Deterministic init mimicking nn.Linear's uniform(-1/sqrt(fan_in), 1/sqrt(fan_in)),
    # stored in [in, out] layout (== weight.T of the PyTorch module).
    bound1 = 1.0 / jnp.sqrt(jnp.float32(D_IN))
    w1 = jax.random.uniform(k_w1, (D_IN, H), minval=-bound1, maxval=bound1,
                            dtype=jnp.float32)
    b1 = jax.random.uniform(k_b1, (H,), minval=-bound1, maxval=bound1,
                            dtype=jnp.float32)
    bound2 = 1.0 / jnp.sqrt(jnp.float32(H))
    w2 = jax.random.uniform(k_w2, (H, D_OUT), minval=-bound2, maxval=bound2,
                            dtype=jnp.float32)
    b2 = jax.random.uniform(k_b2, (D_OUT,), minval=-bound2, maxval=bound2,
                            dtype=jnp.float32)

    # Small-batch check (single block, grid=(1,)) -- the module's typical use.
    x_small = jax.random.normal(k_x, (8, D_IN), dtype=jnp.float32)
    out_small = jax.block_until_ready(decoder2_forward(x_small, w1, b1, w2, b2))
    ref_small = reference_forward(x_small, w1, b1, w2, b2)
    assert out_small.shape == (8, D_OUT)
    assert jnp.allclose(out_small, ref_small, atol=1e-5, rtol=1e-5)

    # Multi-tile check with a ragged tail (exercises the tiled / partial-block path).
    x_big = jax.random.normal(k_x, (1536, D_IN), dtype=jnp.float32)
    out_big = jax.block_until_ready(decoder2_forward(x_big, w1, b1, w2, b2))
    ref_big = reference_forward(x_big, w1, b1, w2, b2)
    assert out_big.shape == (1536, D_OUT)
    assert jnp.allclose(out_big, ref_big, atol=1e-5, rtol=1e-5)

    print("KERNEL_OK")
</pallas_src>

<mosaic_0001>
module attributes {stable_mosaic.version = 11 : i64} {
  func.func @decoder2_kernel(%arg0: i32, %arg1: memref<8x32xf32, #tpu.memory_space<vmem>>, %arg2: memref<64x32xf32, #tpu.memory_space<vmem>>, %arg3: memref<64x1xf32, #tpu.memory_space<vmem>>, %arg4: memref<2x64xf32, #tpu.memory_space<vmem>>, %arg5: memref<2x1xf32, #tpu.memory_space<vmem>>, %arg6: memref<2x8xf32, #tpu.memory_space<vmem>>) attributes {dimension_semantics = [#tpu.dimension_semantics<parallel>], iteration_bounds = array<i64: 1>, scalar_prefetch = 0 : i64, scratch_operands = 0 : i64, tpu.core_type = #tpu.core_type<tc>, window_params = [{transform_indices = @transform_0, window_bounds = array<i64: 8, 32>}, {pipeline_mode = #tpu.pipeline_mode<synchronous>, transform_indices = @transform_1, window_bounds = array<i64: 64, 32>}, {pipeline_mode = #tpu.pipeline_mode<synchronous>, transform_indices = @transform_2, window_bounds = array<i64: 64, 1>}, {pipeline_mode = #tpu.pipeline_mode<synchronous>, transform_indices = @transform_3, window_bounds = array<i64: 2, 64>}, {pipeline_mode = #tpu.pipeline_mode<synchronous>, transform_indices = @transform_4, window_bounds = array<i64: 2, 1>}, {transform_indices = @transform_5, window_bounds = array<i64: 2, 8>}]} {
    %c0 = arith.constant 0 : index
    %c0_0 = arith.constant 0 : index
    %0 = vector.load %arg1[%c0, %c0_0] : memref<8x32xf32, #tpu.memory_space<vmem>>, vector<8x32xf32>
    %c0_1 = arith.constant 0 : index
    %c0_2 = arith.constant 0 : index
    %1 = vector.load %arg2[%c0_1, %c0_2] : memref<64x32xf32, #tpu.memory_space<vmem>>, vector<64x32xf32>
    %cst = arith.constant dense<0.000000e+00> : vector<64x8xf32>
    %2 = tpu.matmul %1, %0, %cst {dimension_numbers = #tpu.dot_dimension_numbers<[1], [1], [0], [0], [0, 0, 1, 0], [], []>} : vector<64x32xf32>, vector<8x32xf32>, vector<64x8xf32> -> vector<64x8xf32>
    %c0_3 = arith.constant 0 : index
    %c0_4 = arith.constant 0 : index
    %3 = vector.load %arg3[%c0_3, %c0_4] : memref<64x1xf32, #tpu.memory_space<vmem>>, vector<64x1xf32>
    %4 = vector.broadcast %3 : vector<64x1xf32> to vector<64x8xf32>
    %5 = arith.addf %2, %4 : vector<64x8xf32>
    %cst_5 = arith.constant 0.00999999977 : f32
    %6 = vector.broadcast %cst_5 : f32 to vector<64x8xf32>
    %7 = arith.mulf %6, %5 : vector<64x8xf32>
    %8 = arith.maximumf %5, %7 : vector<64x8xf32>
    %c0_6 = arith.constant 0 : index
    %c0_7 = arith.constant 0 : index
    %9 = vector.load %arg4[%c0_6, %c0_7] : memref<2x64xf32, #tpu.memory_space<vmem>>, vector<2x64xf32>
    %cst_8 = arith.constant dense<0.000000e+00> : vector<2x8xf32>
    %10 = tpu.matmul %9, %8, %cst_8 {dimension_numbers = #tpu.dot_dimension_numbers<[1], [0], [0], [1], [0, 0, 1, 1], [], []>} : vector<2x64xf32>, vector<64x8xf32>, vector<2x8xf32> -> vector<2x8xf32>
    %c0_9 = arith.constant 0 : index
    %c0_10 = arith.constant 0 : index
    %11 = vector.load %arg5[%c0_9, %c0_10] : memref<2x1xf32, #tpu.memory_space<vmem>>, vector<2x1xf32>
    %12 = vector.broadcast %11 : vector<2x1xf32> to vector<2x8xf32>
    %13 = arith.addf %10, %12 : vector<2x8xf32>
    %c0_11 = arith.constant 0 : index
    %c0_12 = arith.constant 0 : index
    %14 = vector.load %arg6[%c0_11, %c0_12] : memref<2x8xf32, #tpu.memory_space<vmem>>, vector<2x8xf32>
    tpu.vector_store %arg6[%c0_11, %c0_12], %13 {strides = array<i32>} : memref<2x8xf32, #tpu.memory_space<vmem>>, vector<2x8xf32>,
    return
  }
  func.func @transform_0(%arg0: i32) -> (i32, i32) {
    %c0_i32 = arith.constant 0 : i32
    %c0_i32_0 = arith.constant 0 : i32
    return %arg0, %c0_i32 : i32, i32
  }
  func.func @transform_1(%arg0: i32) -> (i32, i32) {
    %c0_i32 = arith.constant 0 : i32
    %c0_i32_0 = arith.constant 0 : i32
    %c0_i32_1 = arith.constant 0 : i32
    return %c0_i32, %c0_i32_0 : i32, i32
  }
  func.func @transform_2(%arg0: i32) -> (i32, i32) {
    %c0_i32 = arith.constant 0 : i32
    %c0_i32_0 = arith.constant 0 : i32
    %c0_i32_1 = arith.constant 0 : i32
    return %c0_i32, %c0_i32_0 : i32, i32
  }
  func.func @transform_3(%arg0: i32) -> (i32, i32) {
    %c0_i32 = arith.constant 0 : i32
    %c0_i32_0 = arith.constant 0 : i32
    %c0_i32_1 = arith.constant 0 : i32
    return %c0_i32, %c0_i32_0 : i32, i32
  }
  func.func @transform_4(%arg0: i32) -> (i32, i32) {
    %c0_i32 = arith.constant 0 : i32
    %c0_i32_0 = arith.constant 0 : i32
    %c0_i32_1 = arith.constant 0 : i32
    return %c0_i32, %c0_i32_0 : i32, i32
  }
  func.func @transform_5(%arg0: i32) -> (i32, i32) {
    %c0_i32 = arith.constant 0 : i32
    %c0_i32_0 = arith.constant 0 : i32
    return %c0_i32, %arg0 : i32, i32
  }
}

</mosaic_0001>

<llo_original>
// kernel: tpu_custom_call.1
$region0: #{tpu_custom_call.1}
  #allocation0 [shape = 'u32[]', space=smem, size = 0x4, offset = 0x4, fixed_abs, tag = 'smem constant byte address 0x4 - core index']
  #allocation1 [shape = 'u32[72,128]{1,0:T(1,128)}', space=vmem, size = 0x9000, scoped, tag = 'internal scratch']
  %s0 = inlined_call_operand.vmem [shape: f32[8,32], index: 0, kind: input, shape index: {}]
  %s1 = inlined_call_operand.vmem [shape: f32[64,32], index: 1, kind: input, shape index: {}]
  %s2 = inlined_call_operand.vmem [shape: f32[64,1], index: 2, kind: input, shape index: {}]
  %s3 = inlined_call_operand.vmem [shape: f32[2,64], index: 3, kind: input, shape index: {}]
  %s4 = inlined_call_operand.vmem [shape: f32[2,1], index: 4, kind: input, shape index: {}]
  %s5 = inlined_call_operand.hbm [shape: f32[2,8], index: 5, kind: output, shape index: {}]
  %s6 = sld [smem:[#allocation0]]
  $region30: #{tpu_custom_call.1} parent=0
    _
  %s8 = ssub.s32 1, %s6
  %s9 = scalar_select 0, %s8, %s6
  $region1: #{tpu_custom_call.1} parent=0
    #allocation2 [shape = 'u8[1024]{0}', space=vmem, size = 0x400, scoped, tag = 'output window, operand 0, single buffered']
    #allocation3 [shape = 's32[1]{0}', space=sflag, size = 0x4, scoped, tag = 'scoped memory for tpu_custom_call.1']
    %10 = vsyncpa [#allocation3], 0
    // Predicated region
    $region2: #{tpu_custom_call.1} parent=1 // pred_check
      _
    $region3: #{tpu_custom_call.1} parent=1 // pred_check_branch
      %12 = sbr.rel (0) target = $region5
    $region4: #{tpu_custom_call.1} parent=1 // pred_region
      _
    $region5: #{tpu_custom_call.1} parent=1 // pred_fallthru
      _
    // Predicated region
    $region6: #{tpu_custom_call.1} parent=1 // pred_check
      _
    $region7: #{tpu_custom_call.1} parent=1 // pred_check_branch
      %14 = sbr.rel (0) target = $region9
    $region8: #{tpu_custom_call.1} parent=1 // pred_region
      _
    $region9: #{tpu_custom_call.1} parent=1 // pred_fallthru
      _
    // Predicated region
    $region10: #{tpu_custom_call.1} parent=1 // pred_check
      _
    $region11: #{tpu_custom_call.1} parent=1 // pred_check_branch
      %16 = sbr.rel (0) target = $region13
    $region12: #{tpu_custom_call.1} parent=1 // pred_region
      _
    $region13: #{tpu_custom_call.1} parent=1 // pred_fallthru
      _
    // Predicated region
    $region14: #{tpu_custom_call.1} parent=1 // pred_check
      _
    $region15: #{tpu_custom_call.1} parent=1 // pred_check_branch
      %18 = sbr.rel (0) target = $region17
    $region16: #{tpu_custom_call.1} parent=1 // pred_region
      _
    $region17: #{tpu_custom_call.1} parent=1 // pred_fallthru
      _
    // Predicated region
    $region18: #{tpu_custom_call.1} parent=1 // pred_check
      _
    $region19: #{tpu_custom_call.1} parent=1 // pred_check_branch
      %20 = sbr.rel (0) target = $region21
    $region20: #{tpu_custom_call.1} parent=1 // pred_region
      _
    $region21: #{tpu_custom_call.1} parent=1 // pred_fallthru
      _
    %v21 = vld [vmem:[%s0] sm:$0xff]
    %v22 = vld [vmem:[%s1] sm:$0xff]
    %v23 = vld [vmem:[%s1 + $0x8] sm:$0xff]
    %v24 = vld [vmem:[%s1 + $0x10] sm:$0xff]
    %v25 = vld [vmem:[%s1 + $0x18] sm:$0xff]
    %v26 = vld [vmem:[%s1 + $0x20] sm:$0xff]
    %v27 = vld [vmem:[%s1 + $0x28] sm:$0xff]
    %v28 = vld [vmem:[%s1 + $0x30] sm:$0xff]
    %v29 = vld [vmem:[%s1 + $0x38] sm:$0xff]
    %v30 = vld [vmem:[%s2] sm:$0xff]
    %v31 = vld [vmem:[%s2 + $0x8] sm:$0xff]
    %v32 = vld [vmem:[%s2 + $0x10] sm:$0xff]
    %v33 = vld [vmem:[%s2 + $0x18] sm:$0xff]
    %v34 = vld [vmem:[%s2 + $0x20] sm:$0xff]
    %v35 = vld [vmem:[%s2 + $0x28] sm:$0xff]
    %v36 = vld [vmem:[%s2 + $0x30] sm:$0xff]
    %v37 = vld [vmem:[%s2 + $0x38] sm:$0xff]
    %39 = vset.pattern.permute.xlu0 0
    %40 = vperm.xlu0 %39, %v30
    %v41 = vpop.permute.xlu0 %40
    %44 = vset.pattern.permute.xlu0 0
    %45 = vperm.xlu0 %44, %v31
    %v46 = vpop.permute.xlu0 %45
    %49 = vset.pattern.permute.xlu0 0
    %50 = vperm.xlu0 %49, %v32
    %v51 = vpop.permute.xlu0 %50
    %54 = vset.pattern.permute.xlu0 0
    %55 = vperm.xlu0 %54, %v33
    %v56 = vpop.permute.xlu0 %55
    %59 = vset.pattern.permute.xlu0 0
    %60 = vperm.xlu0 %59, %v34
    %v61 = vpop.permute.xlu0 %60
    %64 = vset.pattern.permute.xlu0 0
    %65 = vperm.xlu0 %64, %v35
    %v66 = vpop.permute.xlu0 %65
    %69 = vset.pattern.permute.xlu0 0
    %70 = vperm.xlu0 %69, %v36
    %v71 = vpop.permute.xlu0 %70
    %74 = vset.pattern.permute.xlu0 0
    %75 = vperm.xlu0 %74, %v37
    %v76 = vpop.permute.xlu0 %75
    %vm78 = vcmask 261120
    %v80 = vsel %vm78, %v22, 0
    %v83 = vsel %vm78, %v23, 0
    %v86 = vsel %vm78, %v24, 0
    %v89 = vsel %vm78, %v25, 0
    %v92 = vsel %vm78, %v26, 0
    %v95 = vsel %vm78, %v27, 0
    %v98 = vsel %vm78, %v28, 0
    %v101 = vsel %vm78, %v29, 0
    %v104 = vsel %vm78, %v21, 0
    %106 = vmatpush.xpose.msra.mxu0 0.0
    %107 = vmatpush.xpose.msra.mxu0 0.0
    %108 = vmatpush.xpose.msra.mxu0 0.0
    %109 = vmatpush.xpose.msra.mxu0 0.0
    %110 = vmatpush.xpose.msra.mxu0 0.0
    %111 = vmatpush.xpose.msra.mxu0 0.0
    %112 = vmatpush.xpose.msra.mxu0 0.0
    %113 = vmatpush.xpose.msra.mxu0 0.0
    %114 = vmatpush.xpose.msra.mxu0 0.0
    %115 = vmatpush.xpose.msra.mxu0 0.0
    %116 = vmatpush.xpose.msra.mxu0 0.0
    %117 = vmatpush.xpose.msra.mxu0 0.0
    %118 = vmatpush.xpose.msra.mxu0 0.0
    %119 = vmatpush.xpose.msra.mxu0 0.0
    %120 = vmatpush.xpose.msra.mxu0 0.0
    %121 = vmatpush.xpose.msra.mxu0 %v104
    %122 = vmatmul.f32.gmra.mxu0 %v80
    %v123 = vpop.f32.mrf.mxu0
    %v124 = vadd.f32 %v41, %v123
    %125 = vmatmul.f32.gmra.mxu0 %v83
    %v126 = vpop.f32.mrf.mxu0
    %v127 = vadd.f32 %v46, %v126
    %128 = vmatmul.f32.gmra.mxu0 %v86
    %v129 = vpop.f32.mrf.mxu0
    %v130 = vadd.f32 %v51, %v129
    %131 = vmatmul.f32.gmra.mxu0 %v89
    %v132 = vpop.f32.mrf.mxu0
    %v133 = vadd.f32 %v56, %v132
    %134 = vmatmul.f32.gmra.mxu0 %v92
    %v135 = vpop.f32.mrf.mxu0
    %v136 = vadd.f32 %v61, %v135
    %137 = vmatmul.f32.gmra.mxu0 %v95
    %v138 = vpop.f32.mrf.mxu0
    %v139 = vadd.f32 %v66, %v138
    %140 = vmatmul.f32.gmra.mxu0 %v98
    %v141 = vpop.f32.mrf.mxu0
    %v142 = vadd.f32 %v71, %v141
    %143 = vmatmul.f32.gmra.mxu0 %v101
    %v144 = vpop.f32.mrf.mxu0
    %v145 = vadd.f32 %v76, %v144
    %146 = vdwg.mxu0
    %v147 = vmul.f32 %v124, 0.01
    %v148 = vmul.f32 %v127, 0.01
    %v149 = vmul.f32 %v130, 0.01
    %v150 = vmul.f32 %v133, 0.01
    %v151 = vmul.f32 %v136, 0.01
    %v152 = vmul.f32 %v139, 0.01
    %v153 = vmul.f32 %v142, 0.01
    %v154 = vmul.f32 %v145, 0.01
    %v155 = vmax.f32 %v124, %v147
    %v156 = vmax.f32 %v127, %v148
    %v157 = vmax.f32 %v130, %v149
    %v158 = vmax.f32 %v133, %v150
    %v159 = vmax.f32 %v136, %v151
    %v160 = vmax.f32 %v139, %v152
    %v161 = vmax.f32 %v142, %v153
    %v162 = vmax.f32 %v145, %v154
    %v163 = vld [vmem:[%s3] sm:$0x3]
    %v164 = vld [vmem:[%s4] sm:$0x3]
    %166 = vset.pattern.permute.xlu0 0
    %167 = vperm.xlu0 %166, %v164
    %v168 = vpop.permute.xlu0 %167
    %vm170 = vcmask 523264
    %v172 = vsel %vm170, %v163, 0
    %174 = vmatpush.msra.mxu0 0.0
    %175 = vmatpush.msra.mxu0 0.0
    %176 = vmatpush.msra.mxu0 0.0
    %177 = vmatpush.msra.mxu0 0.0
    %178 = vmatpush.msra.mxu0 0.0
    %179 = vmatpush.msra.mxu0 0.0
    %180 = vmatpush.msra.mxu0 0.0
    %181 = vmatpush.msra.mxu0 0.0
    %182 = vmatpush.msra.mxu0 %v162
    %183 = vmatpush.msra.mxu0 %v161
    %184 = vmatpush.msra.mxu0 %v160
    %185 = vmatpush.msra.mxu0 %v159
    %186 = vmatpush.msra.mxu0 %v158
    %187 = vmatpush.msra.mxu0 %v157
    %188 = vmatpush.msra.mxu0 %v156
    %189 = vmatpush.msra.mxu0 %v155
    %190 = vmatmul.f32.gmra.mxu0 %v172
    %v191 = vpop.f32.mrf.mxu0
    %v192 = vadd.f32 %v168, %v191
    %193 = vdwg.mxu0
    %vm194 = vcmask 58368
    %195 = vst.msk [vmem:[#allocation2] sm:$0x3] %vm194, %v192
    // Predicated region
    $region22: #{tpu_custom_call.1} parent=1 // pred_check
      _
    $region23: #{tpu_custom_call.1} parent=1 // pred_check_branch
      %197 = sbr.rel (0) target = $region25
    $region24: #{tpu_custom_call.1} parent=1 // pred_region
      %199 = vsyncadd [#allocation3], 0
      %s201 = sshll.u32 [#allocation2], 4
      %s202 = int_to_ptr.vmem [resolvable:$true] %s201
      %s203 = sshll.u32 %s5, 4
      %s204 = int_to_ptr.hbm [resolvable:$true] %s203
      %206 = dma.vmem_to_hbm [thread:$0]  %s202, 32, %s204, [#allocation3]
    $region25: #{tpu_custom_call.1} parent=1 // pred_fallthru
      _
    // Predicated region
    $region26: #{tpu_custom_call.1} parent=1 // pred_check
      _
    $region27: #{tpu_custom_call.1} parent=1 // pred_check_branch
      %208 = sbr.rel (0) target = $region29
    $region28: #{tpu_custom_call.1} parent=1 // pred_region
      %210 = dma.done [#allocation3], 32
    $region29: #{tpu_custom_call.1} parent=1 // pred_fallthru
      _
    %211 = vsyncpa [#allocation3], 1

</llo_original>
